<compile_context>
chip_gen: v7x
topology: tpu7x:2x2x1
jax: 0.10.0
libtpu: 0.0.40
codegen_flags: <defaults>
</compile_context>

<pallas_src>
import functools

import jax
import jax.numpy as jnp
from jax.experimental import pallas as pl
from jax.experimental.pallas import tpu as pltpu


def _round_up(n, m):
    return ((n + m - 1) // m) * m


# --------------------------------------------------------------------------
# Kernel
# --------------------------------------------------------------------------
def _noisy_mlp_kernel(x_ref, w1_ref, w2_ref, b_ref, o_ref):
    """Fused 2-layer noisy MLP (single grid point, everything VMEM-resident).

    x_ref : [Bp, INp]        f32, zero-padded input
    w1_ref: [3, INp, HIDp]   stacked (mu, sigma, eps), pre-transposed + padded
    w2_ref: [3, HIDp, OUTp]  stacked (mu, sigma, eps), pre-transposed + padded
    b_ref : [6, HIDp]        rows: b1_mu, b1_sigma, b1_eps, b2_mu, b2_sigma, b2_eps
                             (layer-2 rows valid in the first OUTp lanes, rest zero)
    o_ref : [Bp, OUTp]
    """
    out_p = o_ref.shape[1]

    # ---- Layer 1: W_eff = mu + sigma*eps (VPU), x @ W (MXU), +b, tanh (EUP).
    w1 = w1_ref[0] + w1_ref[1] * w1_ref[2]                        # [INp, HIDp]
    b1 = b_ref[0:1, :] + b_ref[1:2, :] * b_ref[2:3, :]            # [1, HIDp]
    h = jnp.tanh(
        jnp.dot(x_ref[...], w1, preferred_element_type=jnp.float32) + b1)

    # ---- Layer 2.
    w2 = w2_ref[0] + w2_ref[1] * w2_ref[2]                        # [HIDp, OUTp]
    b2 = (b_ref[3:4, :out_p]
          + b_ref[4:5, :out_p] * b_ref[5:6, :out_p])              # [1, OUTp]
    o_ref[...] = (jnp.dot(h, w2, preferred_element_type=jnp.float32)
                  + b2).astype(o_ref.dtype)


# --------------------------------------------------------------------------
# One-time parameter packing (do this at init / after reset_noise, NOT per call)
# --------------------------------------------------------------------------
def pack_noisy_nn_params(params):
    """Transpose (out,in)->(in,out), zero-pad to hardware tiles, and stack the
    (mu, sigma, eps) triplets so the kernel sees 3 arrays instead of 12."""
    in_size = params["w1_mu"].shape[1]
    hidden = params["w1_mu"].shape[0]
    out_size = params["w2_mu"].shape[0]

    in_p = _round_up(in_size, 128)
    hid_p = _round_up(hidden, 128)
    out_p = _round_up(out_size, 128)

    def pad_w(a, rows, cols):
        a = jnp.asarray(a, jnp.float32).T                     # (out,in)->(in,out)
        return jnp.pad(a, ((0, rows - a.shape[0]), (0, cols - a.shape[1])))

    def pad_b(a, cols):
        a = jnp.asarray(a, jnp.float32)
        return jnp.pad(a, (0, cols - a.shape[0]))

    w1 = jnp.stack([pad_w(params[k], in_p, hid_p)
                    for k in ("w1_mu", "w1_sigma", "w1_eps")])
    w2 = jnp.stack([pad_w(params[k], hid_p, out_p)
                    for k in ("w2_mu", "w2_sigma", "w2_eps")])
    b = jnp.stack([pad_b(params[k], hid_p)
                   for k in ("b1_mu", "b1_sigma", "b1_eps",
                             "b2_mu", "b2_sigma", "b2_eps")])

    packed = {"w1": w1, "w2": w2, "b": b}
    meta = {"in_size": in_size, "hidden": hidden, "out_size": out_size,
            "in_p": in_p, "hid_p": hid_p, "out_p": out_p}
    return packed, meta


# --------------------------------------------------------------------------
# Forward wrapper
# --------------------------------------------------------------------------
def noisy_nn_forward(x, packed, meta):
    """x: [B, inSize] -> [B, outSize], matching NoisyNN.forward."""
    B, in_size = x.shape
    assert in_size == meta["in_size"]
    in_p, hid_p, out_p = meta["in_p"], meta["hid_p"], meta["out_p"]
    b_p = _round_up(max(B, 8), 8)

    # Single pad op per call (vs. 6 transposes before); zeros in padded
    # rows/lanes contribute exact zeros downstream.
    x_pad = jnp.pad(x.astype(jnp.float32),
                    ((0, b_p - B), (0, in_p - in_size)))

    w1, w2, b = packed["w1"], packed["w2"], packed["b"]

    cost = pl.CostEstimate(
        flops=2 * b_p * (in_p * hid_p + hid_p * out_p)          # two matmuls
              + 2 * (in_p * hid_p + hid_p * out_p),             # noise combines
        transcendentals=b_p * hid_p,                            # tanh
        bytes_accessed=4 * (x_pad.size + w1.size + w2.size + b.size
                            + b_p * out_p),
    )

    vmem = functools.partial(pl.BlockSpec, memory_space=pltpu.VMEM)
    y_pad = pl.pallas_call(
        _noisy_mlp_kernel,
        out_shape=jax.ShapeDtypeStruct((b_p, out_p), jnp.float32),
        grid=(),
        in_specs=[vmem(), vmem(), vmem(), vmem()],
        out_specs=vmem(),
        cost_estimate=cost,
    )(x_pad, w1, w2, b)

    return y_pad[:B, :meta["out_size"]]


# --------------------------------------------------------------------------
# Deterministic synthetic init mirroring NoisyLinear.__init__ / _noise()
# --------------------------------------------------------------------------
def init_noisy_nn_params(key, in_size, hidden, out_size, sigma_init=0.017):
    ks = jax.random.split(key, 8)

    def noisy_linear(k_wmu, k_bmu, k_weps, k_beps, fan_in, fan_out):
        bound = jnp.sqrt(3.0 / fan_in)
        return {
            "w_mu": jax.random.uniform(k_wmu, (fan_out, fan_in),
                                       jnp.float32, -bound, bound),
            "w_sigma": jnp.full((fan_out, fan_in), sigma_init, jnp.float32),
            "w_eps": jax.random.normal(k_weps, (fan_out, fan_in), jnp.float32),
            "b_mu": jax.random.uniform(k_bmu, (fan_out,),
                                       jnp.float32, -bound, bound),
            "b_sigma": jnp.full((fan_out,), sigma_init, jnp.float32),
            "b_eps": jax.random.normal(k_beps, (fan_out,), jnp.float32),
        }

    l1 = noisy_linear(ks[0], ks[1], ks[2], ks[3], in_size, hidden)
    l2 = noisy_linear(ks[4], ks[5], ks[6], ks[7], hidden, out_size)
    return {
        "w1_mu": l1["w_mu"], "w1_sigma": l1["w_sigma"], "w1_eps": l1["w_eps"],
        "b1_mu": l1["b_mu"], "b1_sigma": l1["b_sigma"], "b1_eps": l1["b_eps"],
        "w2_mu": l2["w_mu"], "w2_sigma": l2["w_sigma"], "w2_eps": l2["w_eps"],
        "b2_mu": l2["b_mu"], "b2_sigma": l2["b_sigma"], "b2_eps": l2["b_eps"],
    }


def noisy_nn_reference(x, p):
    """Pure-JAX reference mirroring the PyTorch forward exactly."""
    w1 = p["w1_mu"] + p["w1_sigma"] * p["w1_eps"]
    b1 = p["b1_mu"] + p["b1_sigma"] * p["b1_eps"]
    h = jnp.tanh(x @ w1.T + b1)
    w2 = p["w2_mu"] + p["w2_sigma"] * p["w2_eps"]
    b2 = p["b2_mu"] + p["b2_sigma"] * p["b2_eps"]
    return h @ w2.T + b2


if __name__ == "__main__":
    B, IN_SIZE, HIDDEN, OUT_SIZE = 2, 32, 200, 8   # NoisyNN default layers=[200]

    key = jax.random.PRNGKey(0)
    k_x, k_p = jax.random.split(key)
    x = jax.random.normal(k_x, (B, IN_SIZE), jnp.float32)
    params = init_noisy_nn_params(k_p, IN_SIZE, HIDDEN, OUT_SIZE)

    packed, meta = pack_noisy_nn_params(params)   # one-time packing
    y = noisy_nn_forward(x, packed, meta)
    y = jax.block_until_ready(y)

    y_ref = noisy_nn_reference(x, params)
    assert y.shape == (B, OUT_SIZE)
    assert jnp.allclose(y, y_ref, atol=1e-5, rtol=1e-5), "mismatch vs reference"

    print("KERNEL_OK")
</pallas_src>

<mosaic_0001>
module attributes {stable_mosaic.version = 11 : i64} {
  func.func @_noisy_mlp_kernel(%arg0: memref<8x128xf32, #tpu.memory_space<vmem>>, %arg1: memref<3x128x256xf32, #tpu.memory_space<vmem>>, %arg2: memref<3x256x128xf32, #tpu.memory_space<vmem>>, %arg3: memref<6x256xf32, #tpu.memory_space<vmem>>, %arg4: memref<8x128xf32, #tpu.memory_space<vmem>>) attributes {dimension_semantics = [], scalar_prefetch = 0 : i64, scratch_operands = 0 : i64, tpu.core_type = #tpu.core_type<tc>} {
    %c0 = arith.constant 0 : index
    %c0_0 = arith.constant 0 : index
    %c0_1 = arith.constant 0 : index
    %0 = vector.load %arg1[%c0, %c0_0, %c0_1] : memref<3x128x256xf32, #tpu.memory_space<vmem>>, vector<1x128x256xf32>
    %1 = vector.shape_cast %0 : vector<1x128x256xf32> to vector<128x256xf32>
    %c1 = arith.constant 1 : index
    %c0_2 = arith.constant 0 : index
    %c0_3 = arith.constant 0 : index
    %2 = vector.load %arg1[%c1, %c0_2, %c0_3] : memref<3x128x256xf32, #tpu.memory_space<vmem>>, vector<1x128x256xf32>
    %3 = vector.shape_cast %2 : vector<1x128x256xf32> to vector<128x256xf32>
    %c2 = arith.constant 2 : index
    %c0_4 = arith.constant 0 : index
    %c0_5 = arith.constant 0 : index
    %4 = vector.load %arg1[%c2, %c0_4, %c0_5] : memref<3x128x256xf32, #tpu.memory_space<vmem>>, vector<1x128x256xf32>
    %5 = vector.shape_cast %4 : vector<1x128x256xf32> to vector<128x256xf32>
    %6 = arith.mulf %3, %5 : vector<128x256xf32>
    %7 = arith.addf %1, %6 : vector<128x256xf32>
    %c0_6 = arith.constant 0 : index
    %c0_7 = arith.constant 0 : index
    %8 = vector.load %arg3[%c0_6, %c0_7] : memref<6x256xf32, #tpu.memory_space<vmem>>, vector<1x256xf32>
    %c1_8 = arith.constant 1 : index
    %c0_9 = arith.constant 0 : index
    %9 = vector.load %arg3[%c1_8, %c0_9] : memref<6x256xf32, #tpu.memory_space<vmem>>, vector<1x256xf32>
    %c2_10 = arith.constant 2 : index
    %c0_11 = arith.constant 0 : index
    %10 = vector.load %arg3[%c2_10, %c0_11] : memref<6x256xf32, #tpu.memory_space<vmem>>, vector<1x256xf32>
    %11 = arith.mulf %9, %10 : vector<1x256xf32>
    %12 = arith.addf %8, %11 : vector<1x256xf32>
    %c0_12 = arith.constant 0 : index
    %c0_13 = arith.constant 0 : index
    %13 = vector.load %arg0[%c0_12, %c0_13] : memref<8x128xf32, #tpu.memory_space<vmem>>, vector<8x128xf32>
    %cst = arith.constant dense<0.000000e+00> : vector<8x256xf32>
    %14 = tpu.matmul %13, %7, %cst {dimension_numbers = #tpu.dot_dimension_numbers<[1], [0], [0], [1], [0, 0, 1, 1], [], []>} : vector<8x128xf32>, vector<128x256xf32>, vector<8x256xf32> -> vector<8x256xf32>
    %15 = vector.broadcast %12 : vector<1x256xf32> to vector<8x256xf32>
    %16 = arith.addf %14, %15 : vector<8x256xf32>
    %17 = math.tanh %16 : vector<8x256xf32>
    %c0_14 = arith.constant 0 : index
    %c0_15 = arith.constant 0 : index
    %c0_16 = arith.constant 0 : index
    %18 = vector.load %arg2[%c0_14, %c0_15, %c0_16] : memref<3x256x128xf32, #tpu.memory_space<vmem>>, vector<1x256x128xf32>
    %19 = vector.shape_cast %18 : vector<1x256x128xf32> to vector<256x128xf32>
    %c1_17 = arith.constant 1 : index
    %c0_18 = arith.constant 0 : index
    %c0_19 = arith.constant 0 : index
    %20 = vector.load %arg2[%c1_17, %c0_18, %c0_19] : memref<3x256x128xf32, #tpu.memory_space<vmem>>, vector<1x256x128xf32>
    %21 = vector.shape_cast %20 : vector<1x256x128xf32> to vector<256x128xf32>
    %c2_20 = arith.constant 2 : index
    %c0_21 = arith.constant 0 : index
    %c0_22 = arith.constant 0 : index
    %22 = vector.load %arg2[%c2_20, %c0_21, %c0_22] : memref<3x256x128xf32, #tpu.memory_space<vmem>>, vector<1x256x128xf32>
    %23 = vector.shape_cast %22 : vector<1x256x128xf32> to vector<256x128xf32>
    %24 = arith.mulf %21, %23 : vector<256x128xf32>
    %25 = arith.addf %19, %24 : vector<256x128xf32>
    %c3 = arith.constant 3 : index
    %c0_23 = arith.constant 0 : index
    %26 = vector.load %arg3[%c3, %c0_23] : memref<6x256xf32, #tpu.memory_space<vmem>>, vector<1x128xf32>
    %c4 = arith.constant 4 : index
    %c0_24 = arith.constant 0 : index
    %27 = vector.load %arg3[%c4, %c0_24] : memref<6x256xf32, #tpu.memory_space<vmem>>, vector<1x128xf32>
    %c5 = arith.constant 5 : index
    %c0_25 = arith.constant 0 : index
    %28 = vector.load %arg3[%c5, %c0_25] : memref<6x256xf32, #tpu.memory_space<vmem>>, vector<1x128xf32>
    %29 = arith.mulf %27, %28 : vector<1x128xf32>
    %30 = arith.addf %26, %29 : vector<1x128xf32>
    %cst_26 = arith.constant dense<0.000000e+00> : vector<8x128xf32>
    %31 = tpu.matmul %17, %25, %cst_26 {dimension_numbers = #tpu.dot_dimension_numbers<[1], [0], [0], [1], [0, 0, 1, 1], [], []>} : vector<8x256xf32>, vector<256x128xf32>, vector<8x128xf32> -> vector<8x128xf32>
    %32 = vector.broadcast %30 : vector<1x128xf32> to vector<8x128xf32>
    %33 = arith.addf %31, %32 : vector<8x128xf32>
    %c0_27 = arith.constant 0 : index
    %c0_28 = arith.constant 0 : index
    %34 = vector.load %arg4[%c0_27, %c0_28] : memref<8x128xf32, #tpu.memory_space<vmem>>, vector<8x128xf32>
    tpu.vector_store %arg4[%c0_27, %c0_28], %33 {strides = array<i32>} : memref<8x128xf32, #tpu.memory_space<vmem>>, vector<8x128xf32>,
    return
  }
}

</mosaic_0001>

<llo_original>
// kernel: tpu_custom_call.1
$region0: #{tpu_custom_call.1}
  #allocation0 [shape = 'u32[]', space=smem, size = 0x4, offset = 0x4, fixed_abs, tag = 'smem constant byte address 0x4 - core index']
  #allocation1 [shape = 'u32[144,128]{1,0:T(1,128)}', space=vmem, size = 0x12000, scoped, tag = 'internal scratch']
  %s0 = inlined_call_operand.hbm [shape: f32[8,128], index: 0, kind: input, shape index: {}]
  %s1 = inlined_call_operand.hbm [shape: f32[3,128,256], index: 1, kind: input, shape index: {}]
  %s2 = inlined_call_operand.hbm [shape: f32[3,256,128], index: 2, kind: input, shape index: {}]
  %s3 = inlined_call_operand.hbm [shape: f32[6,256], index: 3, kind: input, shape index: {}]
  %s4 = inlined_call_operand.hbm [shape: f32[8,128], index: 4, kind: output, shape index: {}]
  %s5 = sld [smem:[#allocation0]]
  $region42: #{tpu_custom_call.1} parent=0
    _
  %s7 = ssub.s32 1, %s5
  %s8 = scalar_select 0, %s7, %s5
  $region1: #{tpu_custom_call.1} parent=0
    #allocation2 [shape = 'u8[4096]{0}', space=vmem, size = 0x1000, scoped, tag = 'input window, operand 0, single buffered']
    #allocation3 [shape = 's32[1]{0}', space=sflag, size = 0x4, scoped, tag = 'scoped memory for tpu_custom_call.1']
    #allocation4 [shape = 's32[1]{0}', space=sflag, size = 0x4, scoped, tag = 'scoped memory for tpu_custom_call.1']
    #allocation5 [shape = 'u8[393216]{0}', space=vmem, size = 0x60000, scoped, tag = 'input window, operand 1, single buffered']
    #allocation6 [shape = 's32[1]{0}', space=sflag, size = 0x4, scoped, tag = 'scoped memory for tpu_custom_call.1']
    #allocation7 [shape = 'u8[393216]{0}', space=vmem, size = 0x60000, scoped, tag = 'input window, operand 2, single buffered']
    #allocation8 [shape = 'u8[8192]{0}', space=vmem, size = 0x2000, scoped, tag = 'input window, operand 3, single buffered']
    #allocation9 [shape = 's32[1]{0}', space=sflag, size = 0x4, scoped, tag = 'scoped memory for tpu_custom_call.1']
    #allocation10 [shape = 'u8[4096]{0}', space=vmem, size = 0x1000, scoped, tag = 'output window, operand 0, single buffered']
    %9 = vsyncpa [#allocation3], 0
    %10 = vsyncpa [#allocation6], 0
    %11 = vsyncpa [#allocation9], 0
    %12 = vsyncpa [#allocation4], 0
    // Predicated region
    $region2: #{tpu_custom_call.1} parent=1 // pred_check
      _
    $region3: #{tpu_custom_call.1} parent=1 // pred_check_branch
      %14 = sbr.rel (0) target = $region5
    $region4: #{tpu_custom_call.1} parent=1 // pred_region
      %s16 = ssub.s32 128, 128
      %17 = vsyncadd [#allocation3], %s16
      %s19 = sshll.u32 [#allocation2], 4
      %s20 = int_to_ptr.vmem [resolvable:$true] %s19
      %22 = dma.hbm_to_vmem [thread:$0]  %s0, 128, %s20, [#allocation3]
    $region5: #{tpu_custom_call.1} parent=1 // pred_fallthru
      _
    // Predicated region
    $region6: #{tpu_custom_call.1} parent=1 // pred_check
      _
    $region7: #{tpu_custom_call.1} parent=1 // pred_check_branch
      %24 = sbr.rel (0) target = $region9
    $region8: #{tpu_custom_call.1} parent=1 // pred_region
      %s26 = ssub.s32 12288, 12288
      %27 = vsyncadd [#allocation6], %s26
      %s28 = sshll.u32 [#allocation5], 4
      %s29 = int_to_ptr.vmem [resolvable:$true] %s28
      %34 = dma.hbm_to_vmem [thread:$0]  %s1, 12288, %s29, [#allocation6], 256, 256, 16
    $region9: #{tpu_custom_call.1} parent=1 // pred_fallthru
      _
    // Predicated region
    $region10: #{tpu_custom_call.1} parent=1 // pred_check
      _
    $region11: #{tpu_custom_call.1} parent=1 // pred_check_branch
      %36 = sbr.rel (0) target = $region13
    $region12: #{tpu_custom_call.1} parent=1 // pred_region
      %s38 = ssub.s32 12288, 12288
      %39 = vsyncadd [#allocation6], %s38
      %s40 = sshll.u32 [#allocation7], 4
      %s41 = int_to_ptr.vmem [resolvable:$true] %s40
      %46 = dma.hbm_to_vmem [thread:$0]  %s2, 12288, %s41, [#allocation6], 128, 128, 8
    $region13: #{tpu_custom_call.1} parent=1 // pred_fallthru
      _
    // Predicated region
    $region14: #{tpu_custom_call.1} parent=1 // pred_check
      _
    $region15: #{tpu_custom_call.1} parent=1 // pred_check_branch
      %48 = sbr.rel (0) target = $region17
    $region16: #{tpu_custom_call.1} parent=1 // pred_region
      %s50 = ssub.s32 256, 256
      %51 = vsyncadd [#allocation9], %s50
      %s53 = sshll.u32 [#allocation8], 4
      %s54 = int_to_ptr.vmem [resolvable:$true] %s53
      %56 = dma.hbm_to_vmem [thread:$0]  %s3, 256, %s54, [#allocation9]
    $region17: #{tpu_custom_call.1} parent=1 // pred_fallthru
      _
    // Predicated region
    $region18: #{tpu_custom_call.1} parent=1 // pred_check
      _
    $region19: #{tpu_custom_call.1} parent=1 // pred_check_branch
      %58 = sbr.rel (0) target = $region21
    $region20: #{tpu_custom_call.1} parent=1 // pred_region
      %59 = dma.done [#allocation3], 128
    $region21: #{tpu_custom_call.1} parent=1 // pred_fallthru
      _
    // Predicated region
    $region22: #{tpu_custom_call.1} parent=1 // pred_check
      _
    $region23: #{tpu_custom_call.1} parent=1 // pred_check_branch
      %61 = sbr.rel (0) target = $region25
    $region24: #{tpu_custom_call.1} parent=1 // pred_region
      %62 = dma.done [#allocation6], 12288
    $region25: #{tpu_custom_call.1} parent=1 // pred_fallthru
      _
    // Predicated region
    $region26: #{tpu_custom_call.1} parent=1 // pred_check
      _
    $region27: #{tpu_custom_call.1} parent=1 // pred_check_branch
      %64 = sbr.rel (0) target = $region29
    $region28: #{tpu_custom_call.1} parent=1 // pred_region
      %65 = dma.done [#allocation6], 12288
    $region29: #{tpu_custom_call.1} parent=1 // pred_fallthru
      _
    // Predicated region
    $region30: #{tpu_custom_call.1} parent=1 // pred_check
      _
    $region31: #{tpu_custom_call.1} parent=1 // pred_check_branch
      %67 = sbr.rel (0) target = $region33
    $region32: #{tpu_custom_call.1} parent=1 // pred_region
      %68 = dma.done [#allocation9], 256
    $region33: #{tpu_custom_call.1} parent=1 // pred_fallthru
      _
    %v69 = vld [vmem:[#allocation5] sm:$0xff]
    %v70 = vld [vmem:[#allocation5 + $0x8] sm:$0xff]
    %v71 = vld [vmem:[#allocation5 + $0x10] sm:$0xff]
    %v72 = vld [vmem:[#allocation5 + $0x18] sm:$0xff]
    %v73 = vld [vmem:[#allocation5 + $0x20] sm:$0xff]
    %v74 = vld [vmem:[#allocation5 + $0x28] sm:$0xff]
    %v75 = vld [vmem:[#allocation5 + $0x30] sm:$0xff]
    %v76 = vld [vmem:[#allocation5 + $0x38] sm:$0xff]
    %v77 = vld [vmem:[#allocation5 + $0x40] sm:$0xff]
    %v78 = vld [vmem:[#allocation5 + $0x48] sm:$0xff]
    %v79 = vld [vmem:[#allocation5 + $0x50] sm:$0xff]
    %v80 = vld [vmem:[#allocation5 + $0x58] sm:$0xff]
    %v81 = vld [vmem:[#allocation5 + $0x60] sm:$0xff]
    %v82 = vld [vmem:[#allocation5 + $0x68] sm:$0xff]
    %v83 = vld [vmem:[#allocation5 + $0x70] sm:$0xff]
    %v84 = vld [vmem:[#allocation5 + $0x78] sm:$0xff]
    %v85 = vld [vmem:[#allocation5 + $0x80] sm:$0xff]
    %v86 = vld [vmem:[#allocation5 + $0x88] sm:$0xff]
    %v87 = vld [vmem:[#allocation5 + $0x90] sm:$0xff]
    %v88 = vld [vmem:[#allocation5 + $0x98] sm:$0xff]
    %v89 = vld [vmem:[#allocation5 + $0xa0] sm:$0xff]
    %v90 = vld [vmem:[#allocation5 + $0xa8] sm:$0xff]
    %v91 = vld [vmem:[#allocation5 + $0xb0] sm:$0xff]
    %v92 = vld [vmem:[#allocation5 + $0xb8] sm:$0xff]
    %v93 = vld [vmem:[#allocation5 + $0xc0] sm:$0xff]
    %v94 = vld [vmem:[#allocation5 + $0xc8] sm:$0xff]
    %v95 = vld [vmem:[#allocation5 + $0xd0] sm:$0xff]
    %v96 = vld [vmem:[#allocation5 + $0xd8] sm:$0xff]
    %v97 = vld [vmem:[#allocation5 + $0xe0] sm:$0xff]
    %v98 = vld [vmem:[#allocation5 + $0xe8] sm:$0xff]
    %v99 = vld [vmem:[#allocation5 + $0xf0] sm:$0xff]
    %v100 = vld [vmem:[#allocation5 + $0xf8] sm:$0xff]
    %s101 = scalar_lea.vmem [#allocation5], 256
    %v102 = vld [vmem:[%s101] sm:$0xff]
    %v103 = vld [vmem:[%s101 + $0x8] sm:$0xff]
    %v104 = vld [vmem:[%s101 + $0x10] sm:$0xff]
    %v105 = vld [vmem:[%s101 + $0x18] sm:$0xff]
    %v106 = vld [vmem:[%s101 + $0x20] sm:$0xff]
    %v107 = vld [vmem:[%s101 + $0x28] sm:$0xff]
    %v108 = vld [vmem:[%s101 + $0x30] sm:$0xff]
    %v109 = vld [vmem:[%s101 + $0x38] sm:$0xff]
    %v110 = vld [vmem:[%s101 + $0x40] sm:$0xff]
    %v111 = vld [vmem:[%s101 + $0x48] sm:$0xff]
    %v112 = vld [vmem:[%s101 + $0x50] sm:$0xff]
    %v113 = vld [vmem:[%s101 + $0x58] sm:$0xff]
    %v114 = vld [vmem:[%s101 + $0x60] sm:$0xff]
    %v115 = vld [vmem:[%s101 + $0x68] sm:$0xff]
    %v116 = vld [vmem:[%s101 + $0x70] sm:$0xff]
    %v117 = vld [vmem:[%s101 + $0x78] sm:$0xff]
    %v118 = vld [vmem:[%s101 + $0x80] sm:$0xff]
    %v119 = vld [vmem:[%s101 + $0x88] sm:$0xff]
    %v120 = vld [vmem:[%s101 + $0x90] sm:$0xff]
    %v121 = vld [vmem:[%s101 + $0x98] sm:$0xff]
    %v122 = vld [vmem:[%s101 + $0xa0] sm:$0xff]
    %v123 = vld [vmem:[%s101 + $0xa8] sm:$0xff]
    %v124 = vld [vmem:[%s101 + $0xb0] sm:$0xff]
    %v125 = vld [vmem:[%s101 + $0xb8] sm:$0xff]
    %v126 = vld [vmem:[%s101 + $0xc0] sm:$0xff]
    %v127 = vld [vmem:[%s101 + $0xc8] sm:$0xff]
    %v128 = vld [vmem:[%s101 + $0xd0] sm:$0xff]
    %v129 = vld [vmem:[%s101 + $0xd8] sm:$0xff]
    %v130 = vld [vmem:[%s101 + $0xe0] sm:$0xff]
    %v131 = vld [vmem:[%s101 + $0xe8] sm:$0xff]
    %v132 = vld [vmem:[%s101 + $0xf0] sm:$0xff]
    %v133 = vld [vmem:[%s101 + $0xf8] sm:$0xff]
    %s134 = scalar_lea.vmem [#allocation5], 512
    %v135 = vld [vmem:[%s134] sm:$0xff]
    %v136 = vld [vmem:[%s134 + $0x8] sm:$0xff]
    %v137 = vld [vmem:[%s134 + $0x10] sm:$0xff]
    %v138 = vld [vmem:[%s134 + $0x18] sm:$0xff]
    %v139 = vld [vmem:[%s134 + $0x20] sm:$0xff]
    %v140 = vld [vmem:[%s134 + $0x28] sm:$0xff]
    %v141 = vld [vmem:[%s134 + $0x30] sm:$0xff]
    %v142 = vld [vmem:[%s134 + $0x38] sm:$0xff]
    %v143 = vld [vmem:[%s134 + $0x40] sm:$0xff]
    %v144 = vld [vmem:[%s134 + $0x48] sm:$0xff]
    %v145 = vld [vmem:[%s134 + $0x50] sm:$0xff]
    %v146 = vld [vmem:[%s134 + $0x58] sm:$0xff]
    %v147 = vld [vmem:[%s134 + $0x60] sm:$0xff]
    %v148 = vld [vmem:[%s134 + $0x68] sm:$0xff]
    %v149 = vld [vmem:[%s134 + $0x70] sm:$0xff]
    %v150 = vld [vmem:[%s134 + $0x78] sm:$0xff]
    %v151 = vld [vmem:[%s134 + $0x80] sm:$0xff]
    %v152 = vld [vmem:[%s134 + $0x88] sm:$0xff]
    %v153 = vld [vmem:[%s134 + $0x90] sm:$0xff]
    %v154 = vld [vmem:[%s134 + $0x98] sm:$0xff]
    %v155 = vld [vmem:[%s134 + $0xa0] sm:$0xff]
    %v156 = vld [vmem:[%s134 + $0xa8] sm:$0xff]
    %v157 = vld [vmem:[%s134 + $0xb0] sm:$0xff]
    %v158 = vld [vmem:[%s134 + $0xb8] sm:$0xff]
    %v159 = vld [vmem:[%s134 + $0xc0] sm:$0xff]
    %v160 = vld [vmem:[%s134 + $0xc8] sm:$0xff]
    %v161 = vld [vmem:[%s134 + $0xd0] sm:$0xff]
    %v162 = vld [vmem:[%s134 + $0xd8] sm:$0xff]
    %v163 = vld [vmem:[%s134 + $0xe0] sm:$0xff]
    %v164 = vld [vmem:[%s134 + $0xe8] sm:$0xff]
    %v165 = vld [vmem:[%s134 + $0xf0] sm:$0xff]
    %v166 = vld [vmem:[%s134 + $0xf8] sm:$0xff]
    %v167 = vmul.f32 %v102, %v135
    %v168 = vmul.f32 %v103, %v136
    %v169 = vmul.f32 %v104, %v137
    %v170 = vmul.f32 %v105, %v138
    %v171 = vmul.f32 %v106, %v139
    %v172 = vmul.f32 %v107, %v140
    %v173 = vmul.f32 %v108, %v141
    %v174 = vmul.f32 %v109, %v142
    %v175 = vmul.f32 %v110, %v143
    %v176 = vmul.f32 %v111, %v144
    %v177 = vmul.f32 %v112, %v145
    %v178 = vmul.f32 %v113, %v146
    %v179 = vmul.f32 %v114, %v147
    %v180 = vmul.f32 %v115, %v148
    %v181 = vmul.f32 %v116, %v149
    %v182 = vmul.f32 %v117, %v150
    %v183 = vmul.f32 %v118, %v151
    %v184 = vmul.f32 %v119, %v152
    %v185 = vmul.f32 %v120, %v153
    %v186 = vmul.f32 %v121, %v154
    %v187 = vmul.f32 %v122, %v155
    %v188 = vmul.f32 %v123, %v156
    %v189 = vmul.f32 %v124, %v157
    %v190 = vmul.f32 %v125, %v158
    %v191 = vmul.f32 %v126, %v159
    %v192 = vmul.f32 %v127, %v160
    %v193 = vmul.f32 %v128, %v161
    %v194 = vmul.f32 %v129, %v162
    %v195 = vmul.f32 %v130, %v163
    %v196 = vmul.f32 %v131, %v164
    %v197 = vmul.f32 %v132, %v165
    %v198 = vmul.f32 %v133, %v166
    %v199 = vadd.f32 %v69, %v167
    %v200 = vadd.f32 %v70, %v168
    %v201 = vadd.f32 %v71, %v169
    %v202 = vadd.f32 %v72, %v170
    %v203 = vadd.f32 %v73, %v171
    %v204 = vadd.f32 %v74, %v172
    %v205 = vadd.f32 %v75, %v173
    %v206 = vadd.f32 %v76, %v174
    %v207 = vadd.f32 %v77, %v175
    %v208 = vadd.f32 %v78, %v176
    %v209 = vadd.f32 %v79, %v177
    %v210 = vadd.f32 %v80, %v178
    %v211 = vadd.f32 %v81, %v179
    %v212 = vadd.f32 %v82, %v180
    %v213 = vadd.f32 %v83, %v181
    %v214 = vadd.f32 %v84, %v182
    %v215 = vadd.f32 %v85, %v183
    %v216 = vadd.f32 %v86, %v184
    %v217 = vadd.f32 %v87, %v185
    %v218 = vadd.f32 %v88, %v186
    %v219 = vadd.f32 %v89, %v187
    %v220 = vadd.f32 %v90, %v188
    %v221 = vadd.f32 %v91, %v189
    %v222 = vadd.f32 %v92, %v190
    %v223 = vadd.f32 %v93, %v191
    %v224 = vadd.f32 %v94, %v192
    %v225 = vadd.f32 %v95, %v193
    %v226 = vadd.f32 %v96, %v194
    %v227 = vadd.f32 %v97, %v195
    %v228 = vadd.f32 %v98, %v196
    %v229 = vadd.f32 %v99, %v197
    %v230 = vadd.f32 %v100, %v198
    %v231 = vld [vmem:[#allocation8] ss:$8 sm:$0x3]
    %s232 = scalar_lea.vmem [#allocation8], 1
    %v233 = vld [vmem:[%s232] ss:$8 sm:$0x3]
    %s234 = scalar_lea.vmem [#allocation8], 2
    %v235 = vld [vmem:[%s234] ss:$8 sm:$0x3]
    %v236 = vmul.f32 %v233, %v235
    %v237 = vadd.f32 %v231, %v236
    %v238 = vld [vmem:[#allocation2] sm:$0xff]
    %v240 = vlaneseq
    %v241 = vshrl.u32 %v240, 7
    %v242 = vsub.s32 0, %v241
    %v243 = vrot.slane %v237, %v242
    %v244 = vlaneseq
    %v245 = vshrl.u32 %v244, 7
    %v246 = vsub.s32 1, %v245
    %v247 = vrot.slane %v237, %v246
    %250 = vmatprep.subr.mxu0 %v200
    %251 = vmatpush1.msra.mxu0 %v199
    %252 = vmatprep.subr.mxu0 %v202
    %253 = vmatpush1.msra.mxu0 %v201
    %254 = vmatprep.subr.mxu0 %v204
    %255 = vmatpush1.msra.mxu0 %v203
    %256 = vmatprep.subr.mxu0 %v206
    %257 = vmatpush1.msra.mxu0 %v205
    %258 = vmatprep.subr.mxu0 %v208
    %259 = vmatpush1.msra.mxu0 %v207
    %260 = vmatprep.subr.mxu0 %v210
    %261 = vmatpush1.msra.mxu0 %v209
    %262 = vmatprep.subr.mxu0 %v212
    %263 = vmatpush1.msra.mxu0 %v211
    %264 = vmatprep.subr.mxu0 %v214
    %265 = vmatpush1.msra.mxu0 %v213
    %266 = vmatprep.subr.mxu0 %v216
    %267 = vmatpush1.msra.mxu0 %v215
    %268 = vmatprep.subr.mxu0 %v218
    %269 = vmatpush1.msra.mxu0 %v217
    %270 = vmatprep.subr.mxu0 %v220
    %271 = vmatpush1.msra.mxu0 %v219
    %272 = vmatprep.subr.mxu0 %v222
    %273 = vmatpush1.msra.mxu0 %v221
    %274 = vmatprep.subr.mxu0 %v224
    %275 = vmatpush1.msra.mxu0 %v223
    %276 = vmatprep.subr.mxu0 %v226
    %277 = vmatpush1.msra.mxu0 %v225
    %278 = vmatprep.subr.mxu0 %v228
    %279 = vmatpush1.msra.mxu0 %v227
    %280 = vmatprep.subr.mxu0 %v230
    %281 = vmatpush1.msra.mxu0 %v229
    %282 = vmatprep.subr.mxu0 0.0
    %283 = vmatpush1.msra.mxu0 0.0
    %284 = vmatprep.subr.mxu0 0.0
    %285 = vmatpush1.msra.mxu0 0.0
    %286 = vmatprep.subr.mxu0 0.0
    %287 = vmatpush1.msra.mxu0 0.0
    %288 = vmatprep.subr.mxu0 0.0
    %289 = vmatpush1.msra.mxu0 0.0
    %290 = vmatprep.subr.mxu0 0.0
    %291 = vmatpush1.msra.mxu0 0.0
    %292 = vmatprep.subr.mxu0 0.0
    %293 = vmatpush1.msra.mxu0 0.0
    %294 = vmatprep.subr.mxu0 0.0
    %295 = vmatpush1.msra.mxu0 0.0
    %296 = vmatprep.subr.mxu0 0.0
    %297 = vmatpush1.msra.mxu0 0.0
    %298 = vmatprep.subr.mxu0 0.0
    %299 = vmatpush1.msra.mxu0 0.0
    %300 = vmatprep.subr.mxu0 0.0
    %301 = vmatpush1.msra.mxu0 0.0
    %302 = vmatprep.subr.mxu0 0.0
    %303 = vmatpush1.msra.mxu0 0.0
    %304 = vmatprep.subr.mxu0 0.0
    %305 = vmatpush1.msra.mxu0 0.0
    %306 = vmatprep.subr.mxu0 0.0
    %307 = vmatpush1.msra.mxu0 0.0
    %308 = vmatprep.subr.mxu0 0.0
    %309 = vmatpush1.msra.mxu0 0.0
    %310 = vmatprep.subr.mxu0 0.0
    %311 = vmatpush1.msra.mxu0 0.0
    %312 = vmatprep.subr.mxu0 0.0
    %313 = vmatpush1.msra.mxu0 0.0
    %314 = vmatprep.mubr.f32.mxu0 0.0
    %315 = vmatmul.mubr.f32.gmra.mrb[0].mxu0 %v238
    %v316 = vpop.f32.mrb[0].mxu0
    %v317 = vadd.f32 %v243, %v316
    %v318 = vpop.f32.mrb[0].mxu0
    %v319 = vadd.f32 %v247, %v318
    %320 = vdwg.mxu0
    %v321 = vtanh.pop %v317
    %v322 = vtanh.pop %v319
    %v323 = vld [vmem:[#allocation7] sm:$0xff]
    %v324 = vld [vmem:[#allocation7 + $0x8] sm:$0xff]
    %v325 = vld [vmem:[#allocation7 + $0x10] sm:$0xff]
    %v326 = vld [vmem:[#allocation7 + $0x18] sm:$0xff]
    %v327 = vld [vmem:[#allocation7 + $0x20] sm:$0xff]
    %v328 = vld [vmem:[#allocation7 + $0x28] sm:$0xff]
    %v329 = vld [vmem:[#allocation7 + $0x30] sm:$0xff]
    %v330 = vld [vmem:[#allocation7 + $0x38] sm:$0xff]
    %v331 = vld [vmem:[#allocation7 + $0x40] sm:$0xff]
    %v332 = vld [vmem:[#allocation7 + $0x48] sm:$0xff]
    %v333 = vld [vmem:[#allocation7 + $0x50] sm:$0xff]
    %v334 = vld [vmem:[#allocation7 + $0x58] sm:$0xff]
    %v335 = vld [vmem:[#allocation7 + $0x60] sm:$0xff]
    %v336 = vld [vmem:[#allocation7 + $0x68] sm:$0xff]
    %v337 = vld [vmem:[#allocation7 + $0x70] sm:$0xff]
    %v338 = vld [vmem:[#allocation7 + $0x78] sm:$0xff]
    %v339 = vld [vmem:[#allocation7 + $0x80] sm:$0xff]
    %v340 = vld [vmem:[#allocation7 + $0x88] sm:$0xff]
    %v341 = vld [vmem:[#allocation7 + $0x90] sm:$0xff]
    %v342 = vld [vmem:[#allocation7 + $0x98] sm:$0xff]
    %v343 = vld [vmem:[#allocation7 + $0xa0] sm:$0xff]
    %v344 = vld [vmem:[#allocation7 + $0xa8] sm:$0xff]
    %v345 = vld [vmem:[#allocation7 + $0xb0] sm:$0xff]
    %v346 = vld [vmem:[#allocation7 + $0xb8] sm:$0xff]
    %v347 = vld [vmem:[#allocation7 + $0xc0] sm:$0xff]
    %v348 = vld [vmem:[#allocation7 + $0xc8] sm:$0xff]
    %v349 = vld [vmem:[#allocation7 + $0xd0] sm:$0xff]
    %v350 = vld [vmem:[#allocation7 + $0xd8] sm:$0xff]
    %v351 = vld [vmem:[#allocation7 + $0xe0] sm:$0xff]
    %v352 = vld [vmem:[#allocation7 + $0xe8] sm:$0xff]
    %v353 = vld [vmem:[#allocation7 + $0xf0] sm:$0xff]
    %v354 = vld [vmem:[#allocation7 + $0xf8] sm:$0xff]
    %s355 = scalar_lea.vmem [#allocation7], 256
    %v356 = vld [vmem:[%s355] sm:$0xff]
    %v357 = vld [vmem:[%s355 + $0x8] sm:$0xff]
    %v358 = vld [vmem:[%s355 + $0x10] sm:$0xff]
    %v359 = vld [vmem:[%s355 + $0x18] sm:$0xff]
    %v360 = vld [vmem:[%s355 + $0x20] sm:$0xff]
    %v361 = vld [vmem:[%s355 + $0x28] sm:$0xff]
    %v362 = vld [vmem:[%s355 + $0x30] sm:$0xff]
    %v363 = vld [vmem:[%s355 + $0x38] sm:$0xff]
    %v364 = vld [vmem:[%s355 + $0x40] sm:$0xff]
    %v365 = vld [vmem:[%s355 + $0x48] sm:$0xff]
    %v366 = vld [vmem:[%s355 + $0x50] sm:$0xff]
    %v367 = vld [vmem:[%s355 + $0x58] sm:$0xff]
    %v368 = vld [vmem:[%s355 + $0x60] sm:$0xff]
    %v369 = vld [vmem:[%s355 + $0x68] sm:$0xff]
    %v370 = vld [vmem:[%s355 + $0x70] sm:$0xff]
    %v371 = vld [vmem:[%s355 + $0x78] sm:$0xff]
    %v372 = vld [vmem:[%s355 + $0x80] sm:$0xff]
    %v373 = vld [vmem:[%s355 + $0x88] sm:$0xff]
    %v374 = vld [vmem:[%s355 + $0x90] sm:$0xff]
    %v375 = vld [vmem:[%s355 + $0x98] sm:$0xff]
    %v376 = vld [vmem:[%s355 + $0xa0] sm:$0xff]
    %v377 = vld [vmem:[%s355 + $0xa8] sm:$0xff]
    %v378 = vld [vmem:[%s355 + $0xb0] sm:$0xff]
    %v379 = vld [vmem:[%s355 + $0xb8] sm:$0xff]
    %v380 = vld [vmem:[%s355 + $0xc0] sm:$0xff]
    %v381 = vld [vmem:[%s355 + $0xc8] sm:$0xff]
    %v382 = vld [vmem:[%s355 + $0xd0] sm:$0xff]
    %v383 = vld [vmem:[%s355 + $0xd8] sm:$0xff]
    %v384 = vld [vmem:[%s355 + $0xe0] sm:$0xff]
    %v385 = vld [vmem:[%s355 + $0xe8] sm:$0xff]
    %v386 = vld [vmem:[%s355 + $0xf0] sm:$0xff]
    %v387 = vld [vmem:[%s355 + $0xf8] sm:$0xff]
    %s388 = scalar_lea.vmem [#allocation7], 512
    %v389 = vld [vmem:[%s388] sm:$0xff]
    %v390 = vld [vmem:[%s388 + $0x8] sm:$0xff]
    %v391 = vld [vmem:[%s388 + $0x10] sm:$0xff]
    %v392 = vld [vmem:[%s388 + $0x18] sm:$0xff]
    %v393 = vld [vmem:[%s388 + $0x20] sm:$0xff]
    %v394 = vld [vmem:[%s388 + $0x28] sm:$0xff]
    %v395 = vld [vmem:[%s388 + $0x30] sm:$0xff]
    %v396 = vld [vmem:[%s388 + $0x38] sm:$0xff]
    %v397 = vld [vmem:[%s388 + $0x40] sm:$0xff]
    %v398 = vld [vmem:[%s388 + $0x48] sm:$0xff]
    %v399 = vld [vmem:[%s388 + $0x50] sm:$0xff]
    %v400 = vld [vmem:[%s388 + $0x58] sm:$0xff]
    %v401 = vld [vmem:[%s388 + $0x60] sm:$0xff]
    %v402 = vld [vmem:[%s388 + $0x68] sm:$0xff]
    %v403 = vld [vmem:[%s388 + $0x70] sm:$0xff]
    %v404 = vld [vmem:[%s388 + $0x78] sm:$0xff]
    %v405 = vld [vmem:[%s388 + $0x80] sm:$0xff]
    %v406 = vld [vmem:[%s388 + $0x88] sm:$0xff]
    %v407 = vld [vmem:[%s388 + $0x90] sm:$0xff]
    %v408 = vld [vmem:[%s388 + $0x98] sm:$0xff]
    %v409 = vld [vmem:[%s388 + $0xa0] sm:$0xff]
    %v410 = vld [vmem:[%s388 + $0xa8] sm:$0xff]
    %v411 = vld [vmem:[%s388 + $0xb0] sm:$0xff]
    %v412 = vld [vmem:[%s388 + $0xb8] sm:$0xff]
    %v413 = vld [vmem:[%s388 + $0xc0] sm:$0xff]
    %v414 = vld [vmem:[%s388 + $0xc8] sm:$0xff]
    %v415 = vld [vmem:[%s388 + $0xd0] sm:$0xff]
    %v416 = vld [vmem:[%s388 + $0xd8] sm:$0xff]
    %v417 = vld [vmem:[%s388 + $0xe0] sm:$0xff]
    %v418 = vld [vmem:[%s388 + $0xe8] sm:$0xff]
    %v419 = vld [vmem:[%s388 + $0xf0] sm:$0xff]
    %v420 = vld [vmem:[%s388 + $0xf8] sm:$0xff]
    %v421 = vmul.f32 %v356, %v389
    %v422 = vmul.f32 %v357, %v390
    %v423 = vmul.f32 %v358, %v391
    %v424 = vmul.f32 %v359, %v392
    %v425 = vmul.f32 %v360, %v393
    %v426 = vmul.f32 %v361, %v394
    %v427 = vmul.f32 %v362, %v395
    %v428 = vmul.f32 %v363, %v396
    %v429 = vmul.f32 %v364, %v397
    %v430 = vmul.f32 %v365, %v398
    %v431 = vmul.f32 %v366, %v399
    %v432 = vmul.f32 %v367, %v400
    %v433 = vmul.f32 %v368, %v401
    %v434 = vmul.f32 %v369, %v402
    %v435 = vmul.f32 %v370, %v403
    %v436 = vmul.f32 %v371, %v404
    %v437 = vmul.f32 %v372, %v405
    %v438 = vmul.f32 %v373, %v406
    %v439 = vmul.f32 %v374, %v407
    %v440 = vmul.f32 %v375, %v408
    %v441 = vmul.f32 %v376, %v409
    %v442 = vmul.f32 %v377, %v410
    %v443 = vmul.f32 %v378, %v411
    %v444 = vmul.f32 %v379, %v412
    %v445 = vmul.f32 %v380, %v413
    %v446 = vmul.f32 %v381, %v414
    %v447 = vmul.f32 %v382, %v415
    %v448 = vmul.f32 %v383, %v416
    %v449 = vmul.f32 %v384, %v417
    %v450 = vmul.f32 %v385, %v418
    %v451 = vmul.f32 %v386, %v419
    %v452 = vmul.f32 %v387, %v420
    %v453 = vadd.f32 %v323, %v421
    %v454 = vadd.f32 %v324, %v422
    %v455 = vadd.f32 %v325, %v423
    %v456 = vadd.f32 %v326, %v424
    %v457 = vadd.f32 %v327, %v425
    %v458 = vadd.f32 %v328, %v426
    %v459 = vadd.f32 %v329, %v427
    %v460 = vadd.f32 %v330, %v428
    %v461 = vadd.f32 %v331, %v429
    %v462 = vadd.f32 %v332, %v430
    %v463 = vadd.f32 %v333, %v431
    %v464 = vadd.f32 %v334, %v432
    %v465 = vadd.f32 %v335, %v433
    %v466 = vadd.f32 %v336, %v434
    %v467 = vadd.f32 %v337, %v435
    %v468 = vadd.f32 %v338, %v436
    %v469 = vadd.f32 %v339, %v437
    %v470 = vadd.f32 %v340, %v438
    %v471 = vadd.f32 %v341, %v439
    %v472 = vadd.f32 %v342, %v440
    %v473 = vadd.f32 %v343, %v441
    %v474 = vadd.f32 %v344, %v442
    %v475 = vadd.f32 %v345, %v443
    %v476 = vadd.f32 %v346, %v444
    %v477 = vadd.f32 %v347, %v445
    %v478 = vadd.f32 %v348, %v446
    %v479 = vadd.f32 %v349, %v447
    %v480 = vadd.f32 %v350, %v448
    %v481 = vadd.f32 %v351, %v449
    %v482 = vadd.f32 %v352, %v450
    %v483 = vadd.f32 %v353, %v451
    %v484 = vadd.f32 %v354, %v452
    %v485 = vld [vmem:[#allocation8 + $0x3] ss:$0 sm:$0xff]
    %v486 = vld [vmem:[#allocation8 + $0x4] ss:$0 sm:$0xff]
    %v487 = vld [vmem:[#allocation8 + $0x5] ss:$0 sm:$0xff]
    %v488 = vmul.f32 %v486, %v487
    %v489 = vadd.f32 %v485, %v488
    %490 = vmatprep.subr.mxu0 0.0
    %491 = vmatpush1.msra.mxu0 %v453
    %492 = vmatprep.subr.mxu0 0.0
    %493 = vmatpush1.msra.mxu0 %v454
    %494 = vmatprep.subr.mxu0 0.0
    %495 = vmatpush1.msra.mxu0 %v455
    %496 = vmatprep.subr.mxu0 0.0
    %497 = vmatpush1.msra.mxu0 %v456
    %498 = vmatprep.subr.mxu0 0.0
    %499 = vmatpush1.msra.mxu0 %v457
    %500 = vmatprep.subr.mxu0 0.0
    %501 = vmatpush1.msra.mxu0 %v458
    %502 = vmatprep.subr.mxu0 0.0
    %503 = vmatpush1.msra.mxu0 %v459
    %504 = vmatprep.subr.mxu0 0.0
    %505 = vmatpush1.msra.mxu0 %v460
    %506 = vmatprep.subr.mxu0 0.0
    %507 = vmatpush1.msra.mxu0 %v461
    %508 = vmatprep.subr.mxu0 0.0
    %509 = vmatpush1.msra.mxu0 %v462
    %510 = vmatprep.subr.mxu0 0.0
    %511 = vmatpush1.msra.mxu0 %v463
    %512 = vmatprep.subr.mxu0 0.0
    %513 = vmatpush1.msra.mxu0 %v464
    %514 = vmatprep.subr.mxu0 0.0
    %515 = vmatpush1.msra.mxu0 %v465
    %516 = vmatprep.subr.mxu0 0.0
    %517 = vmatpush1.msra.mxu0 %v466
    %518 = vmatprep.subr.mxu0 0.0
    %519 = vmatpush1.msra.mxu0 %v467
    %520 = vmatprep.subr.mxu0 0.0
    %521 = vmatpush1.msra.mxu0 %v468
    %522 = vmatprep.subr.mxu0 0.0
    %523 = vmatpush1.msra.mxu0 %v469
    %524 = vmatprep.subr.mxu0 0.0
    %525 = vmatpush1.msra.mxu0 %v470
    %526 = vmatprep.subr.mxu0 0.0
    %527 = vmatpush1.msra.mxu0 %v471
    %528 = vmatprep.subr.mxu0 0.0
    %529 = vmatpush1.msra.mxu0 %v472
    %530 = vmatprep.subr.mxu0 0.0
    %531 = vmatpush1.msra.mxu0 %v473
    %532 = vmatprep.subr.mxu0 0.0
    %533 = vmatpush1.msra.mxu0 %v474
    %534 = vmatprep.subr.mxu0 0.0
    %535 = vmatpush1.msra.mxu0 %v475
    %536 = vmatprep.subr.mxu0 0.0
    %537 = vmatpush1.msra.mxu0 %v476
    %538 = vmatprep.subr.mxu0 0.0
    %539 = vmatpush1.msra.mxu0 %v477
    %540 = vmatprep.subr.mxu0 0.0
    %541 = vmatpush1.msra.mxu0 %v478
    %542 = vmatprep.subr.mxu0 0.0
    %543 = vmatpush1.msra.mxu0 %v479
    %544 = vmatprep.subr.mxu0 0.0
    %545 = vmatpush1.msra.mxu0 %v480
    %546 = vmatprep.subr.mxu0 0.0
    %547 = vmatpush1.msra.mxu0 %v481
    %548 = vmatprep.subr.mxu0 0.0
    %549 = vmatpush1.msra.mxu0 %v482
    %550 = vmatprep.subr.mxu0 0.0
    %551 = vmatpush1.msra.mxu0 %v483
    %552 = vmatprep.subr.mxu0 0.0
    %553 = vmatpush1.msra.mxu0 %v484
    %554 = vmatprep.mubr.f32.mxu0 %v322
    %555 = vmatmul.mubr.f32.gmra.mrb[0].mxu0 %v321
    %v556 = vpop.f32.mrb[0].mxu0
    %v557 = vadd.f32 %v489, %v556
    %v558 = vpop.f32.mrb[0].mxu0
    %559 = vdwg.mxu0
    %560 = vst [vmem:[#allocation10] sm:$0xff] %v557
    // Predicated region
    $region34: #{tpu_custom_call.1} parent=1 // pred_check
      _
    $region35: #{tpu_custom_call.1} parent=1 // pred_check_branch
      %562 = sbr.rel (0) target = $region37
    $region36: #{tpu_custom_call.1} parent=1 // pred_region
      %s564 = ssub.s32 128, 128
      %565 = vsyncadd [#allocation4], %s564
      %s567 = sshll.u32 [#allocation10], 4
      %s568 = int_to_ptr.vmem [resolvable:$true] %s567
      %570 = dma.vmem_to_hbm [thread:$0]  %s568, 128, %s4, [#allocation4]
    $region37: #{tpu_custom_call.1} parent=1 // pred_fallthru
      _
    // Predicated region
    $region38: #{tpu_custom_call.1} parent=1 // pred_check
      _
    $region39: #{tpu_custom_call.1} parent=1 // pred_check_branch
      %572 = sbr.rel (0) target = $region41
    $region40: #{tpu_custom_call.1} parent=1 // pred_region
      %573 = dma.done [#allocation4], 128
    $region41: #{tpu_custom_call.1} parent=1 // pred_fallthru
      _
    %574 = vsyncpa [#allocation3], 1
    %575 = vsyncpa [#allocation6], 1
    %576 = vsyncpa [#allocation9], 1
    %577 = vsyncpa [#allocation4], 1

</llo_original>
